<compile_context>
chip_gen: v5e
topology: v5e:2x2
jax: 0.10.0
libtpu: 0.0.40
codegen_flags: <defaults>
</compile_context>

<pallas_src>
import functools

import jax
import jax.numpy as jnp
from jax.experimental import pallas as pl
from jax.experimental.pallas import tpu as pltpu

P_DROP = 0.1       # nn.Dropout(0.1)
LN_EPS = 1e-5      # nn.LayerNorm default eps


def residual_kernel(x_ref, u_ref, w_ref, b_ref, gamma_ref, beta_ref, o_ref,
                    *, p_drop):
    """Fused: y = Linear(x); z = x + Dropout(y); out = LayerNorm(z)."""
    x = x_ref[...].astype(jnp.float32)                          # (TM, D)

    # ---- sublayer: Linear(dim, dim) — bf16 MXU inputs, f32 accumulation ---
    y = jnp.dot(x_ref[...].astype(jnp.bfloat16), w_ref[...],
                preferred_element_type=jnp.float32)
    y = y + b_ref[...].astype(jnp.float32)                      # (1, D) bcast

    # ---- dropout (training: drop with prob p, scale kept by 1/(1-p)) ------
    if p_drop > 0.0:
        keep = u_ref[...] >= p_drop                             # bool mask
        y = jnp.where(keep, y * (1.0 / (1.0 - p_drop)), 0.0)
    # (eval mode: p_drop == 0.0 -> dropout compiled out entirely)

    # ---- residual add ------------------------------------------------------
    z = x + y

    # ---- LayerNorm over last dim D (biased variance, like PyTorch) --------
    mean = jnp.mean(z, axis=-1, keepdims=True)
    centered = z - mean
    var = jnp.mean(centered * centered, axis=-1, keepdims=True)
    z_hat = centered * jax.lax.rsqrt(var + LN_EPS)
    out = z_hat * gamma_ref[...] + beta_ref[...]

    o_ref[...] = out.astype(o_ref.dtype)


def _pick_row_tile(n):
    """Largest row tile (multiple of 8, <=512) that divides N."""
    for tm in (512, 256, 128, 64, 32, 16, 8):
        if n % tm == 0:
            return tm
    return n


@functools.partial(jax.jit, static_argnames=("training",))
def residual_forward(x, w, b, gamma, beta, key, training=True):
    """x: [B, S, D]; w: [D, D]; b/gamma/beta: [1, D]; key: PRNG key."""
    B, S, D = x.shape
    N = B * S
    x2 = x.reshape(N, D)

    # Weight streamed once per kernel in bf16 (halves W's HBM traffic).
    w_bf16 = w.astype(jnp.bfloat16)

    # Dropout uniforms generated host-side; same row tiling as x so every
    # grid tile sees an independent slice of the mask.
    if training:
        u = jax.random.uniform(key, (N, D), dtype=jnp.float32)
        p_drop = P_DROP
    else:
        u = jnp.zeros((N, D), dtype=jnp.float32)   # unused (compiled out)
        p_drop = 0.0

    TM = _pick_row_tile(N)
    grid = (pl.cdiv(N, TM),)

    out = pl.pallas_call(
        functools.partial(residual_kernel, p_drop=p_drop),
        out_shape=jax.ShapeDtypeStruct((N, D), x.dtype),
        grid=grid,
        in_specs=[
            pl.BlockSpec((TM, D), lambda i: (i, 0)),   # x       (tiled rows)
            pl.BlockSpec((TM, D), lambda i: (i, 0)),   # uniforms(tiled rows)
            pl.BlockSpec((D, D), lambda i: (0, 0)),    # W       (resident)
            pl.BlockSpec((1, D), lambda i: (0, 0)),    # bias    (resident)
            pl.BlockSpec((1, D), lambda i: (0, 0)),    # gamma   (resident)
            pl.BlockSpec((1, D), lambda i: (0, 0)),    # beta    (resident)
        ],
        out_specs=pl.BlockSpec((TM, D), lambda i: (i, 0)),
        compiler_params=pltpu.CompilerParams(
            dimension_semantics=("parallel",),         # shard rows across TCs
            vmem_limit_bytes=48 * 1024 * 1024),        # fits v7x's 64 MiB VMEM
    )(x2, u, w_bf16, b, gamma, beta)

    return out.reshape(B, S, D)


def _reference(x, w, b, gamma, beta, key):
    """Pure-JAX reference using the same mask / bf16 matmul casts."""
    B, S, D = x.shape
    x2 = x.reshape(B * S, D).astype(jnp.float32)
    y = jnp.dot(x2.astype(jnp.bfloat16), w.astype(jnp.bfloat16),
                preferred_element_type=jnp.float32) + b
    u = jax.random.uniform(key, (B * S, D), dtype=jnp.float32)
    y = jnp.where(u >= P_DROP, y * (1.0 / (1.0 - P_DROP)), 0.0)
    z = x2 + y
    mean = jnp.mean(z, axis=-1, keepdims=True)
    var = jnp.mean((z - mean) ** 2, axis=-1, keepdims=True)
    out = (z - mean) * jax.lax.rsqrt(var + LN_EPS) * gamma + beta
    return out.reshape(B, S, D)


if __name__ == "__main__":
    B, S, D = 2, 8, 128   # batch=2, seq=8, dimension=128 (lane-aligned)

    key = jax.random.PRNGKey(0)
    kx, kw, kb, kdrop = jax.random.split(key, 4)

    x = jax.random.normal(kx, (B, S, D), dtype=jnp.float32)

    # Deterministic parameter init (synthetic, not a checkpoint load).
    w = jax.random.normal(kw, (D, D), dtype=jnp.float32) * (1.0 / jnp.sqrt(D))
    b = jax.random.normal(kb, (1, D), dtype=jnp.float32) * 0.01
    gamma = jnp.ones((1, D), dtype=jnp.float32)    # nn.LayerNorm weight init
    beta = jnp.zeros((1, D), dtype=jnp.float32)    # nn.LayerNorm bias init

    out = residual_forward(x, w, b, gamma, beta, kdrop, training=True)
    jax.block_until_ready(out)
    assert out.shape == (B, S, D)

    ref = _reference(x, w, b, gamma, beta, kdrop)
    assert jnp.allclose(out, ref, atol=2e-2, rtol=2e-2), "mismatch vs reference"

    # TODO(synk): the PyTorch module accepts an arbitrary sublayer; only a
    # Linear(dim, dim) sublayer is fused here.
    print("KERNEL_OK")
</pallas_src>

<mosaic_0001>
module attributes {stable_mosaic.version = 11 : i64} {
  func.func @residual_kernel(%arg0: i32, %arg1: memref<16x128xf32, #tpu.memory_space<vmem>>, %arg2: memref<16x128xf32, #tpu.memory_space<vmem>>, %arg3: memref<128x128xbf16, #tpu.memory_space<vmem>>, %arg4: memref<1x128xf32, #tpu.memory_space<vmem>>, %arg5: memref<1x128xf32, #tpu.memory_space<vmem>>, %arg6: memref<1x128xf32, #tpu.memory_space<vmem>>, %arg7: memref<16x128xf32, #tpu.memory_space<vmem>>) attributes {dimension_semantics = [#tpu.dimension_semantics<parallel>], iteration_bounds = array<i64: 1>, scalar_prefetch = 0 : i64, scratch_operands = 0 : i64, tpu.core_type = #tpu.core_type<tc>, window_params = [{transform_indices = @transform_0, window_bounds = array<i64: 16, 128>}, {transform_indices = @transform_1, window_bounds = array<i64: 16, 128>}, {pipeline_mode = #tpu.pipeline_mode<synchronous>, transform_indices = @transform_2, window_bounds = array<i64: 128, 128>}, {pipeline_mode = #tpu.pipeline_mode<synchronous>, transform_indices = @transform_3, window_bounds = array<i64: 1, 128>}, {pipeline_mode = #tpu.pipeline_mode<synchronous>, transform_indices = @transform_4, window_bounds = array<i64: 1, 128>}, {pipeline_mode = #tpu.pipeline_mode<synchronous>, transform_indices = @transform_5, window_bounds = array<i64: 1, 128>}, {transform_indices = @transform_6, window_bounds = array<i64: 16, 128>}]} {
    %c0 = arith.constant 0 : index
    %c0_0 = arith.constant 0 : index
    %0 = vector.load %arg1[%c0, %c0_0] : memref<16x128xf32, #tpu.memory_space<vmem>>, vector<16x128xf32>
    %c0_1 = arith.constant 0 : index
    %c0_2 = arith.constant 0 : index
    %1 = vector.load %arg1[%c0_1, %c0_2] : memref<16x128xf32, #tpu.memory_space<vmem>>, vector<16x128xf32>
    %2 = arith.truncf %1 : vector<16x128xf32> to vector<16x128xbf16>
    %c0_3 = arith.constant 0 : index
    %c0_4 = arith.constant 0 : index
    %3 = vector.load %arg3[%c0_3, %c0_4] : memref<128x128xbf16, #tpu.memory_space<vmem>>, vector<128x128xbf16>
    %cst = arith.constant dense<0.000000e+00> : vector<16x128xf32>
    %4 = tpu.matmul %2, %3, %cst {dimension_numbers = #tpu.dot_dimension_numbers<[1], [0], [0], [1], [0, 0, 1, 1], [], []>} : vector<16x128xbf16>, vector<128x128xbf16>, vector<16x128xf32> -> vector<16x128xf32>
    %c0_5 = arith.constant 0 : index
    %c0_6 = arith.constant 0 : index
    %5 = vector.load %arg4[%c0_5, %c0_6] : memref<1x128xf32, #tpu.memory_space<vmem>>, vector<1x128xf32>
    %6 = vector.broadcast %5 : vector<1x128xf32> to vector<16x128xf32>
    %7 = arith.addf %4, %6 : vector<16x128xf32>
    %c0_7 = arith.constant 0 : index
    %c0_8 = arith.constant 0 : index
    %8 = vector.load %arg2[%c0_7, %c0_8] : memref<16x128xf32, #tpu.memory_space<vmem>>, vector<16x128xf32>
    %cst_9 = arith.constant 1.000000e-01 : f32
    %9 = vector.broadcast %cst_9 : f32 to vector<16x128xf32>
    %10 = arith.cmpf oge, %8, %9 : vector<16x128xf32>
    %cst_10 = arith.constant 1.11111116 : f32
    %11 = vector.broadcast %cst_10 : f32 to vector<16x128xf32>
    %12 = arith.mulf %7, %11 : vector<16x128xf32>
    %cst_11 = arith.constant 0.000000e+00 : f32
    %13 = vector.broadcast %cst_11 : f32 to vector<16x128xf32>
    %14 = arith.select %10, %12, %13 : vector<16x128xi1>, vector<16x128xf32>
    %15 = arith.addf %0, %14 : vector<16x128xf32>
    %cst_12 = arith.constant dense<0.000000e+00> : vector<16xf32>
    %16 = vector.multi_reduction <add>, %15, %cst_12 [1] : vector<16x128xf32> to vector<16xf32>
    %17 = vector.shape_cast %16 : vector<16xf32> to vector<16x1xf32>
    %cst_13 = arith.constant 1.280000e+02 : f32
    %18 = vector.broadcast %cst_13 : f32 to vector<16x1xf32>
    %19 = arith.divf %17, %18 : vector<16x1xf32>
    %20 = vector.broadcast %19 : vector<16x1xf32> to vector<16x128xf32>
    %21 = arith.subf %15, %20 : vector<16x128xf32>
    %22 = arith.mulf %21, %21 : vector<16x128xf32>
    %cst_14 = arith.constant dense<0.000000e+00> : vector<16xf32>
    %23 = vector.multi_reduction <add>, %22, %cst_14 [1] : vector<16x128xf32> to vector<16xf32>
    %24 = vector.shape_cast %23 : vector<16xf32> to vector<16x1xf32>
    %cst_15 = arith.constant 1.280000e+02 : f32
    %25 = vector.broadcast %cst_15 : f32 to vector<16x1xf32>
    %26 = arith.divf %24, %25 : vector<16x1xf32>
    %cst_16 = arith.constant 9.99999974E-6 : f32
    %27 = vector.broadcast %cst_16 : f32 to vector<16x1xf32>
    %28 = arith.addf %26, %27 : vector<16x1xf32>
    %29 = math.rsqrt %28 : vector<16x1xf32>
    %30 = vector.broadcast %29 : vector<16x1xf32> to vector<16x128xf32>
    %31 = arith.mulf %21, %30 : vector<16x128xf32>
    %c0_17 = arith.constant 0 : index
    %c0_18 = arith.constant 0 : index
    %32 = vector.load %arg5[%c0_17, %c0_18] : memref<1x128xf32, #tpu.memory_space<vmem>>, vector<1x128xf32>
    %33 = vector.broadcast %32 : vector<1x128xf32> to vector<16x128xf32>
    %34 = arith.mulf %31, %33 : vector<16x128xf32>
    %c0_19 = arith.constant 0 : index
    %c0_20 = arith.constant 0 : index
    %35 = vector.load %arg6[%c0_19, %c0_20] : memref<1x128xf32, #tpu.memory_space<vmem>>, vector<1x128xf32>
    %36 = vector.broadcast %35 : vector<1x128xf32> to vector<16x128xf32>
    %37 = arith.addf %34, %36 : vector<16x128xf32>
    %c0_21 = arith.constant 0 : index
    %c0_22 = arith.constant 0 : index
    %38 = vector.load %arg7[%c0_21, %c0_22] : memref<16x128xf32, #tpu.memory_space<vmem>>, vector<16x128xf32>
    tpu.vector_store %arg7[%c0_21, %c0_22], %37 {strides = array<i32>} : memref<16x128xf32, #tpu.memory_space<vmem>>, vector<16x128xf32>,
    return
  }
  func.func @transform_0(%arg0: i32) -> (i32, i32) {
    %c0_i32 = arith.constant 0 : i32
    %c0_i32_0 = arith.constant 0 : i32
    return %arg0, %c0_i32 : i32, i32
  }
  func.func @transform_1(%arg0: i32) -> (i32, i32) {
    %c0_i32 = arith.constant 0 : i32
    %c0_i32_0 = arith.constant 0 : i32
    return %arg0, %c0_i32 : i32, i32
  }
  func.func @transform_2(%arg0: i32) -> (i32, i32) {
    %c0_i32 = arith.constant 0 : i32
    %c0_i32_0 = arith.constant 0 : i32
    %c0_i32_1 = arith.constant 0 : i32
    return %c0_i32, %c0_i32_0 : i32, i32
  }
  func.func @transform_3(%arg0: i32) -> (i32, i32) {
    %c0_i32 = arith.constant 0 : i32
    %c0_i32_0 = arith.constant 0 : i32
    %c0_i32_1 = arith.constant 0 : i32
    return %c0_i32, %c0_i32_0 : i32, i32
  }
  func.func @transform_4(%arg0: i32) -> (i32, i32) {
    %c0_i32 = arith.constant 0 : i32
    %c0_i32_0 = arith.constant 0 : i32
    %c0_i32_1 = arith.constant 0 : i32
    return %c0_i32, %c0_i32_0 : i32, i32
  }
  func.func @transform_5(%arg0: i32) -> (i32, i32) {
    %c0_i32 = arith.constant 0 : i32
    %c0_i32_0 = arith.constant 0 : i32
    %c0_i32_1 = arith.constant 0 : i32
    return %c0_i32, %c0_i32_0 : i32, i32
  }
  func.func @transform_6(%arg0: i32) -> (i32, i32) {
    %c0_i32 = arith.constant 0 : i32
    %c0_i32_0 = arith.constant 0 : i32
    return %arg0, %c0_i32 : i32, i32
  }
}

</mosaic_0001>

<llo_original>
// kernel: residual_forward.1
$region0: #{residual_forward.1}
  #allocation0 [shape = 'u32[]', space=smem, size = 0x4, offset = 0x4, fixed_abs, tag = 'smem constant byte address 0x4 - core index']
  #allocation1 [shape = 'u32[72,128]{1,0:T(1,128)}', space=vmem, size = 0x9000, scoped, tag = 'internal scratch']
  %s0 = inlined_call_operand.vmem [shape: f32[16,128], index: 0, kind: input, shape index: {}]
  %s1 = inlined_call_operand.vmem [shape: f32[16,128], index: 1, kind: input, shape index: {}]
  %s2 = inlined_call_operand.vmem [shape: bf16[128,128], index: 2, kind: input, shape index: {}]
  %s3 = inlined_call_operand.vmem [shape: f32[1,128], index: 3, kind: input, shape index: {}]
  %s4 = inlined_call_operand.vmem [shape: f32[1,128], index: 4, kind: input, shape index: {}]
  %s5 = inlined_call_operand.vmem [shape: f32[1,128], index: 5, kind: input, shape index: {}]
  %s6 = inlined_call_operand.hbm [shape: f32[16,128], index: 6, kind: output, shape index: {}]
  %s7 = sld [smem:[#allocation0]]
  $region34: #{residual_forward.1} parent=0
    _
  %s9 = ssub.s32 1, %s7
  %s10 = scalar_select 0, %s9, %s7
  $region1: #{residual_forward.1} parent=0
    #allocation2 [shape = 'u8[8192]{0}', space=vmem, size = 0x2000, scoped, tag = 'output window, operand 0, single buffered']
    #allocation3 [shape = 's32[1]{0}', space=sflag, size = 0x4, scoped, tag = 'scoped memory for residual_forward.1']
    %11 = vsyncpa [#allocation3], 0
    // Predicated region
    $region2: #{residual_forward.1} parent=1 // pred_check
      _
    $region3: #{residual_forward.1} parent=1 // pred_check_branch
      %13 = sbr.rel (0) target = $region5
    $region4: #{residual_forward.1} parent=1 // pred_region
      _
    $region5: #{residual_forward.1} parent=1 // pred_fallthru
      _
    // Predicated region
    $region6: #{residual_forward.1} parent=1 // pred_check
      _
    $region7: #{residual_forward.1} parent=1 // pred_check_branch
      %15 = sbr.rel (0) target = $region9
    $region8: #{residual_forward.1} parent=1 // pred_region
      _
    $region9: #{residual_forward.1} parent=1 // pred_fallthru
      _
    // Predicated region
    $region10: #{residual_forward.1} parent=1 // pred_check
      _
    $region11: #{residual_forward.1} parent=1 // pred_check_branch
      %17 = sbr.rel (0) target = $region13
    $region12: #{residual_forward.1} parent=1 // pred_region
      _
    $region13: #{residual_forward.1} parent=1 // pred_fallthru
      _
    // Predicated region
    $region14: #{residual_forward.1} parent=1 // pred_check
      _
    $region15: #{residual_forward.1} parent=1 // pred_check_branch
      %19 = sbr.rel (0) target = $region17
    $region16: #{residual_forward.1} parent=1 // pred_region
      _
    $region17: #{residual_forward.1} parent=1 // pred_fallthru
      _
    // Predicated region
    $region18: #{residual_forward.1} parent=1 // pred_check
      _
    $region19: #{residual_forward.1} parent=1 // pred_check_branch
      %21 = sbr.rel (0) target = $region21
    $region20: #{residual_forward.1} parent=1 // pred_region
      _
    $region21: #{residual_forward.1} parent=1 // pred_fallthru
      _
    // Predicated region
    $region22: #{residual_forward.1} parent=1 // pred_check
      _
    $region23: #{residual_forward.1} parent=1 // pred_check_branch
      %23 = sbr.rel (0) target = $region25
    $region24: #{residual_forward.1} parent=1 // pred_region
      _
    $region25: #{residual_forward.1} parent=1 // pred_fallthru
      _
    %v24 = vld [vmem:[%s0] sm:$0xff]
    %v25 = vld [vmem:[%s0 + $0x8] sm:$0xff]
    %v26 = vpack.c.bf16 %v25, %v24
    %v27 = vld [vmem:[%s2] sm:$0xf]
    %v28 = vld [vmem:[%s2 + $0x4] sm:$0xf]
    %v29 = vld [vmem:[%s2 + $0x8] sm:$0xf]
    %v30 = vld [vmem:[%s2 + $0xc] sm:$0xf]
    %v31 = vld [vmem:[%s2 + $0x10] sm:$0xf]
    %v32 = vld [vmem:[%s2 + $0x14] sm:$0xf]
    %v33 = vld [vmem:[%s2 + $0x18] sm:$0xf]
    %v34 = vld [vmem:[%s2 + $0x1c] sm:$0xf]
    %v35 = vld [vmem:[%s2 + $0x20] sm:$0xf]
    %v36 = vld [vmem:[%s2 + $0x24] sm:$0xf]
    %v37 = vld [vmem:[%s2 + $0x28] sm:$0xf]
    %v38 = vld [vmem:[%s2 + $0x2c] sm:$0xf]
    %v39 = vld [vmem:[%s2 + $0x30] sm:$0xf]
    %v40 = vld [vmem:[%s2 + $0x34] sm:$0xf]
    %v41 = vld [vmem:[%s2 + $0x38] sm:$0xf]
    %v42 = vld [vmem:[%s2 + $0x3c] sm:$0xf]
    %v43 = vld [vmem:[%s3] sm:$0x1]
    %v45 = vperm.slane %v43, 0
    %v63 = vunpack.c.l.b16 %v27
    %v64 = vunpack.c.l.b16 %v28
    %v65 = vunpack.c.l.b16 %v29
    %v66 = vunpack.c.l.b16 %v30
    %v67 = vunpack.c.l.b16 %v31
    %v68 = vunpack.c.l.b16 %v32
    %v69 = vunpack.c.l.b16 %v33
    %v70 = vunpack.c.l.b16 %v34
    %v71 = vunpack.c.l.b16 %v35
    %v72 = vunpack.c.l.b16 %v36
    %v73 = vunpack.c.l.b16 %v37
    %v74 = vunpack.c.l.b16 %v38
    %v75 = vunpack.c.l.b16 %v39
    %v76 = vunpack.c.l.b16 %v40
    %v77 = vunpack.c.l.b16 %v41
    %v78 = vunpack.c.l.b16 %v42
    %v79 = vpack.c.b16 %v64, %v63
    %v80 = vpack.c.b16 %v66, %v65
    %v81 = vpack.c.b16 %v68, %v67
    %v82 = vpack.c.b16 %v70, %v69
    %v83 = vpack.c.b16 %v72, %v71
    %v84 = vpack.c.b16 %v74, %v73
    %v85 = vpack.c.b16 %v76, %v75
    %v86 = vpack.c.b16 %v78, %v77
    %95 = vmatpush.bf16.msra.mxu0 %v86
    %96 = vmatpush.bf16.msra.mxu0 %v85
    %97 = vmatpush.bf16.msra.mxu0 %v84
    %98 = vmatpush.bf16.msra.mxu0 %v83
    %99 = vmatpush.bf16.msra.mxu0 %v82
    %100 = vmatpush.bf16.msra.mxu0 %v81
    %101 = vmatpush.bf16.msra.mxu0 %v80
    %102 = vmatpush.bf16.msra.mxu0 %v79
    %103 = vmatmul.bf16.gmra.mxu0 %v26
    %v104 = vpop.f32.mrf.mxu0
    %v105 = vadd.f32 %v45, %v104
    %v106 = vpop.f32.mrf.mxu0
    %v107 = vadd.f32 %v45, %v106
    %108 = vdwg.mxu0
    %v109 = vld [vmem:[%s1] sm:$0xff]
    %v110 = vld [vmem:[%s1 + $0x8] sm:$0xff]
    %vm111 = vcmp.ge.f32.partialorder %v109, 0.1
    %vm112 = vcmp.ge.f32.partialorder %v110, 0.1
    %v113 = vmul.f32 %v105, 1.1111112
    %v114 = vmul.f32 %v107, 1.1111112
    %v115 = vsel %vm111, %v113, 0.0
    %v116 = vsel %vm112, %v114, 0.0
    %v117 = vadd.f32 %v24, %v115
    %v118 = vadd.f32 %v25, %v116
    %119 = vadd.xlane.f32.xlu0 %v117
    %v120 = vpop.xlane.xlu0 %119
    %121 = vadd.xlane.f32.xlu0 %v118
    %v122 = vpop.xlane.xlu0 %121
    %v123 = vrcp.pop 128.0
    %v124 = vmul.f32 128.0, %v123
    %v125 = vsub.f32 1.0, %v124
    %v126 = vmul.f32 %v123, %v125
    %v127 = vadd.f32 %v123, %v126
    %vm128 = vweird.f32 %v123
    %v129 = vsel %vm128, %v123, %v127
    %v130 = vmul.f32 %v120, %v129
    %v131 = vmul.f32 %v122, %v129
    %v132 = vsub.f32 %v117, %v130
    %v133 = vsub.f32 %v118, %v131
    %v134 = vmul.f32 %v132, %v132
    %v135 = vmul.f32 %v133, %v133
    %136 = vadd.xlane.f32.xlu0 %v134
    %v137 = vpop.xlane.xlu0 %136
    %138 = vadd.xlane.f32.xlu0 %v135
    %v139 = vpop.xlane.xlu0 %138
    %v140 = vmul.f32 %v137, %v129
    %v141 = vmul.f32 %v139, %v129
    %v142 = vadd.f32 %v140, 1e-05
    %v143 = vadd.f32 %v141, 1e-05
    %v144 = vrsqrt.pop %v142
    %v145 = vmul.f32 %v144, %v142
    %v146 = vmul.f32 %v145, %v144
    %v147 = vmul.f32 0.5, %v146
    %v148 = vsub.f32 1.5, %v147
    %v149 = vmul.f32 %v144, %v148
    %vm150 = vweird.f32 %v142
    %vm151 = vweird.f32 %v144
    %vm152 = vmor %vm150, %vm151
    %v153 = vsel %vm152, %v144, %v149
    %v154 = vrsqrt.pop %v143
    %v155 = vmul.f32 %v154, %v143
    %v156 = vmul.f32 %v155, %v154
    %v157 = vmul.f32 0.5, %v156
    %v158 = vsub.f32 1.5, %v157
    %v159 = vmul.f32 %v154, %v158
    %vm160 = vweird.f32 %v143
    %vm161 = vweird.f32 %v154
    %vm162 = vmor %vm160, %vm161
    %v163 = vsel %vm162, %v154, %v159
    %v164 = vmul.f32 %v132, %v153
    %v165 = vmul.f32 %v133, %v163
    %v166 = vld [vmem:[%s4] sm:$0x1]
    %v168 = vperm.slane %v166, 0
    %v170 = vmul.f32 %v164, %v168
    %v171 = vmul.f32 %v165, %v168
    %v172 = vld [vmem:[%s5] sm:$0x1]
    %v174 = vperm.slane %v172, 0
    %v176 = vadd.f32 %v170, %v174
    %v177 = vadd.f32 %v171, %v174
    %178 = vst [vmem:[#allocation2] sm:$0xff] %v176
    %179 = vst [vmem:[#allocation2 + $0x8] sm:$0xff] %v177
    // Predicated region
    $region26: #{residual_forward.1} parent=1 // pred_check
      _
    $region27: #{residual_forward.1} parent=1 // pred_check_branch
      %181 = sbr.rel (0) target = $region29
    $region28: #{residual_forward.1} parent=1 // pred_region
      %183 = vsyncadd [#allocation3], 0
      %s184 = sshll.u32 [#allocation2], 4
      %s185 = int_to_ptr.vmem [resolvable:$true] %s184
      %s186 = sshll.u32 %s6, 4
      %s187 = int_to_ptr.hbm [resolvable:$true] %s186
      %192 = dma.vmem_to_hbm [thread:$0]  %s185, 256, %s187, [#allocation3], 128, 128, 8
    $region29: #{residual_forward.1} parent=1 // pred_fallthru
      _
    // Predicated region
    $region30: #{residual_forward.1} parent=1 // pred_check
      _
    $region31: #{residual_forward.1} parent=1 // pred_check_branch
      %194 = sbr.rel (0) target = $region33
    $region32: #{residual_forward.1} parent=1 // pred_region
      %196 = dma.done [#allocation3], 256
    $region33: #{residual_forward.1} parent=1 // pred_fallthru
      _
    %197 = vsyncpa [#allocation3], 1

</llo_original>
